<compile_context>
chip_gen: v7x
topology: tpu7x:2x2x1
jax: 0.10.0
libtpu: 0.0.40
codegen_flags: <defaults>
</compile_context>

<pallas_src>
import math

import jax
import jax.numpy as jnp
from jax import lax
from jax.experimental import pallas as pl
from jax.experimental.pallas import tpu as pltpu

# Module hyperparameters (from the PyTorch source).
N_EMB = 128
HIDDEN = 4 * N_EMB  # 512
ROW_ALIGN = 16      # bf16 packs 2 rows per sublane -> 16-row block granularity


def _round_up(x, m):
    return ((x + m - 1) // m) * m


def _mlp_kernel(x_ref, wfc_ref, bfc_ref, wproj_ref, bproj_ref, o_ref):
    """One grid step handles one (bm, N_EMB) block of rows.

    x_ref:     (bm, N_EMB)        bf16   VMEM
    wfc_ref:   (N_EMB, HIDDEN)    bf16   pre-transposed c_fc weight (in, out)
    bfc_ref:   (1, HIDDEN)        f32
    wproj_ref: (HIDDEN, N_EMB)    bf16   pre-transposed c_proj weight (in, out)
    bproj_ref: (1, N_EMB)         f32
    o_ref:     (bm, N_EMB)        f32
    """
    # c_fc: (bm, 128) @ (128, 512) -> (bm, 512); bf16 operands, f32 accumulation.
    h = jnp.dot(x_ref[...], wfc_ref[...], preferred_element_type=jnp.float32)
    h = h + bfc_ref[...]

    # Exact (erf-based) GELU, matching torch.nn.GELU() default. Kept in f32:
    # v5e has no bf16 VALU, and f32 keeps numerics tight on all generations.
    h = 0.5 * h * (1.0 + lax.erf(h * (1.0 / math.sqrt(2.0))))

    # c_proj: (bm, 512) @ (512, 128) -> (bm, 128); cast activations to bf16 for the MXU.
    y = jnp.dot(h.astype(wproj_ref.dtype), wproj_ref[...],
                preferred_element_type=jnp.float32)
    y = y + bproj_ref[...]

    # dropout == identity in eval mode.
    o_ref[...] = y.astype(o_ref.dtype)


def prepare_mlp_params(w_fc, b_fc, w_proj, b_proj, compute_dtype=jnp.bfloat16):
    """One-time param prep: torch-style (out, in) -> (in, out), weights in bf16."""
    wfc_t = jnp.asarray(w_fc).T.astype(compute_dtype)        # (N_EMB, HIDDEN)
    bfc2 = jnp.asarray(b_fc).reshape(1, HIDDEN).astype(jnp.float32)
    wproj_t = jnp.asarray(w_proj).T.astype(compute_dtype)    # (HIDDEN, N_EMB)
    bproj2 = jnp.asarray(b_proj).reshape(1, N_EMB).astype(jnp.float32)
    return wfc_t, bfc2, wproj_t, bproj2


def mlp_forward(x, wfc_t, bfc2, wproj_t, bproj2, *, block_m=512):
    """x: (..., N_EMB) -> (..., N_EMB). Params come from prepare_mlp_params."""
    orig_shape = x.shape
    C = orig_shape[-1]
    assert C == N_EMB

    # Flatten all leading dims into one row axis so the MXU sees one big M.
    xm = x.reshape(-1, C)
    M = xm.shape[0]

    # Split rows into n_steps ~equal blocks:
    #  * bm <= block_m (512 sits on the flat part of the tile-sweep curve),
    #  * >= 2 grid steps whenever M > block_m (v7x: both TensorCores get work),
    #  * bm is a multiple of 16 (bf16 sublane packing), padding minimized.
    n_steps = max(1, pl.cdiv(M, block_m))
    bm = _round_up(max(1, pl.cdiv(M, n_steps)), ROW_ALIGN)
    M_pad = n_steps * bm

    xm = xm.astype(jnp.bfloat16)
    if M_pad != M:
        xm = jnp.pad(xm, ((0, M_pad - M), (0, 0)))

    out = pl.pallas_call(
        _mlp_kernel,
        out_shape=jax.ShapeDtypeStruct((M_pad, C), jnp.float32),
        grid_spec=pltpu.PrefetchScalarGridSpec(
            num_scalar_prefetch=0,
            grid=(n_steps,),
            in_specs=[
                pl.BlockSpec((bm, C), lambda i: (i, 0)),          # x rows
                pl.BlockSpec((C, HIDDEN), lambda i: (0, 0)),      # c_fc weight (in, out)
                pl.BlockSpec((1, HIDDEN), lambda i: (0, 0)),      # c_fc bias
                pl.BlockSpec((HIDDEN, C), lambda i: (0, 0)),      # c_proj weight (in, out)
                pl.BlockSpec((1, C), lambda i: (0, 0)),           # c_proj bias
            ],
            out_specs=pl.BlockSpec((bm, C), lambda i: (i, 0)),
        ),
        compiler_params=pltpu.CompilerParams(
            dimension_semantics=("parallel",),
        ),
    )(xm, wfc_t, bfc2, wproj_t, bproj2)

    if M_pad != M:
        out = out[:M]
    return out.reshape(orig_shape).astype(x.dtype)


def _reference(x, wfc_t, bfc2, wproj_t, bproj2):
    """Pure-JAX reference with the same bf16-cast operands (eval-mode forward)."""
    xb = x.reshape(-1, N_EMB).astype(jnp.bfloat16).astype(jnp.float32)
    h = xb @ wfc_t.astype(jnp.float32) + bfc2
    h = 0.5 * h * (1.0 + lax.erf(h / math.sqrt(2.0)))     # exact GELU
    hb = h.astype(jnp.bfloat16).astype(jnp.float32)
    y = hb @ wproj_t.astype(jnp.float32) + bproj2
    return y.reshape(x.shape)


if __name__ == "__main__":
    key = jax.random.PRNGKey(0)
    k_x, k_w1, k_b1, k_w2, k_b2 = jax.random.split(key, 5)

    B, T = 2, 8  # small shapes consistent with the GPT-2 context

    # torch.nn.Linear-style uniform(-1/sqrt(fan_in), 1/sqrt(fan_in)) init, (out, in) layout.
    bound1 = 1.0 / math.sqrt(N_EMB)
    bound2 = 1.0 / math.sqrt(HIDDEN)
    w_fc = jax.random.uniform(k_w1, (HIDDEN, N_EMB), jnp.float32, -bound1, bound1)
    b_fc = jax.random.uniform(k_b1, (HIDDEN,), jnp.float32, -bound1, bound1)
    w_proj = jax.random.uniform(k_w2, (N_EMB, HIDDEN), jnp.float32, -bound2, bound2)
    b_proj = jax.random.uniform(k_b2, (N_EMB,), jnp.float32, -bound2, bound2)

    x = jax.random.normal(k_x, (B, T, N_EMB), jnp.float32)

    # One-time parameter prep (transpose + bf16 cast), then the kernel call.
    params = prepare_mlp_params(w_fc, b_fc, w_proj, b_proj)
    out = mlp_forward(x, *params)
    out = jax.block_until_ready(out)

    ref = _reference(x, *params)
    assert out.shape == (B, T, N_EMB)
    assert jnp.allclose(out, ref, atol=5e-3, rtol=5e-3), "mismatch vs JAX reference"

    print("KERNEL_OK")
</pallas_src>

<mosaic_0001>
module attributes {stable_mosaic.version = 11 : i64} {
  func.func @_mlp_kernel(%arg0: i32, %arg1: memref<16x128xbf16, #tpu.memory_space<vmem>>, %arg2: memref<128x512xbf16, #tpu.memory_space<vmem>>, %arg3: memref<1x512xf32, #tpu.memory_space<vmem>>, %arg4: memref<512x128xbf16, #tpu.memory_space<vmem>>, %arg5: memref<1x128xf32, #tpu.memory_space<vmem>>, %arg6: memref<16x128xf32, #tpu.memory_space<vmem>>) attributes {dimension_semantics = [#tpu.dimension_semantics<parallel>], iteration_bounds = array<i64: 1>, scalar_prefetch = 0 : i64, scratch_operands = 0 : i64, tpu.core_type = #tpu.core_type<tc>, window_params = [{transform_indices = @transform_0, window_bounds = array<i64: 16, 128>}, {pipeline_mode = #tpu.pipeline_mode<synchronous>, transform_indices = @transform_1, window_bounds = array<i64: 128, 512>}, {pipeline_mode = #tpu.pipeline_mode<synchronous>, transform_indices = @transform_2, window_bounds = array<i64: 1, 512>}, {pipeline_mode = #tpu.pipeline_mode<synchronous>, transform_indices = @transform_3, window_bounds = array<i64: 512, 128>}, {pipeline_mode = #tpu.pipeline_mode<synchronous>, transform_indices = @transform_4, window_bounds = array<i64: 1, 128>}, {transform_indices = @transform_5, window_bounds = array<i64: 16, 128>}]} {
    %c0 = arith.constant 0 : index
    %c0_0 = arith.constant 0 : index
    %0 = vector.load %arg1[%c0, %c0_0] : memref<16x128xbf16, #tpu.memory_space<vmem>>, vector<16x128xbf16>
    %c0_1 = arith.constant 0 : index
    %c0_2 = arith.constant 0 : index
    %1 = vector.load %arg2[%c0_1, %c0_2] : memref<128x512xbf16, #tpu.memory_space<vmem>>, vector<128x512xbf16>
    %cst = arith.constant dense<0.000000e+00> : vector<16x512xf32>
    %2 = tpu.matmul %0, %1, %cst {dimension_numbers = #tpu.dot_dimension_numbers<[1], [0], [0], [1], [0, 0, 1, 1], [], []>} : vector<16x128xbf16>, vector<128x512xbf16>, vector<16x512xf32> -> vector<16x512xf32>
    %c0_3 = arith.constant 0 : index
    %c0_4 = arith.constant 0 : index
    %3 = vector.load %arg3[%c0_3, %c0_4] : memref<1x512xf32, #tpu.memory_space<vmem>>, vector<1x512xf32>
    %4 = vector.broadcast %3 : vector<1x512xf32> to vector<16x512xf32>
    %5 = arith.addf %2, %4 : vector<16x512xf32>
    %cst_5 = arith.constant 5.000000e-01 : f32
    %6 = vector.broadcast %cst_5 : f32 to vector<16x512xf32>
    %7 = arith.mulf %6, %5 : vector<16x512xf32>
    %cst_6 = arith.constant 0.707106769 : f32
    %8 = vector.broadcast %cst_6 : f32 to vector<16x512xf32>
    %9 = arith.mulf %5, %8 : vector<16x512xf32>
    %10 = math.erf %9 : vector<16x512xf32>
    %cst_7 = arith.constant 1.000000e+00 : f32
    %11 = vector.broadcast %cst_7 : f32 to vector<16x512xf32>
    %12 = arith.addf %11, %10 : vector<16x512xf32>
    %13 = arith.mulf %7, %12 : vector<16x512xf32>
    %14 = arith.truncf %13 : vector<16x512xf32> to vector<16x512xbf16>
    %c0_8 = arith.constant 0 : index
    %c0_9 = arith.constant 0 : index
    %15 = vector.load %arg4[%c0_8, %c0_9] : memref<512x128xbf16, #tpu.memory_space<vmem>>, vector<512x128xbf16>
    %cst_10 = arith.constant dense<0.000000e+00> : vector<16x128xf32>
    %16 = tpu.matmul %14, %15, %cst_10 {dimension_numbers = #tpu.dot_dimension_numbers<[1], [0], [0], [1], [0, 0, 1, 1], [], []>} : vector<16x512xbf16>, vector<512x128xbf16>, vector<16x128xf32> -> vector<16x128xf32>
    %c0_11 = arith.constant 0 : index
    %c0_12 = arith.constant 0 : index
    %17 = vector.load %arg5[%c0_11, %c0_12] : memref<1x128xf32, #tpu.memory_space<vmem>>, vector<1x128xf32>
    %18 = vector.broadcast %17 : vector<1x128xf32> to vector<16x128xf32>
    %19 = arith.addf %16, %18 : vector<16x128xf32>
    %c0_13 = arith.constant 0 : index
    %c0_14 = arith.constant 0 : index
    %20 = vector.load %arg6[%c0_13, %c0_14] : memref<16x128xf32, #tpu.memory_space<vmem>>, vector<16x128xf32>
    tpu.vector_store %arg6[%c0_13, %c0_14], %19 {strides = array<i32>} : memref<16x128xf32, #tpu.memory_space<vmem>>, vector<16x128xf32>,
    return
  }
  func.func @transform_0(%arg0: i32) -> (i32, i32) {
    %c0_i32 = arith.constant 0 : i32
    %c0_i32_0 = arith.constant 0 : i32
    return %arg0, %c0_i32 : i32, i32
  }
  func.func @transform_1(%arg0: i32) -> (i32, i32) {
    %c0_i32 = arith.constant 0 : i32
    %c0_i32_0 = arith.constant 0 : i32
    %c0_i32_1 = arith.constant 0 : i32
    return %c0_i32, %c0_i32_0 : i32, i32
  }
  func.func @transform_2(%arg0: i32) -> (i32, i32) {
    %c0_i32 = arith.constant 0 : i32
    %c0_i32_0 = arith.constant 0 : i32
    %c0_i32_1 = arith.constant 0 : i32
    return %c0_i32, %c0_i32_0 : i32, i32
  }
  func.func @transform_3(%arg0: i32) -> (i32, i32) {
    %c0_i32 = arith.constant 0 : i32
    %c0_i32_0 = arith.constant 0 : i32
    %c0_i32_1 = arith.constant 0 : i32
    return %c0_i32, %c0_i32_0 : i32, i32
  }
  func.func @transform_4(%arg0: i32) -> (i32, i32) {
    %c0_i32 = arith.constant 0 : i32
    %c0_i32_0 = arith.constant 0 : i32
    %c0_i32_1 = arith.constant 0 : i32
    return %c0_i32, %c0_i32_0 : i32, i32
  }
  func.func @transform_5(%arg0: i32) -> (i32, i32) {
    %c0_i32 = arith.constant 0 : i32
    %c0_i32_0 = arith.constant 0 : i32
    return %arg0, %c0_i32 : i32, i32
  }
}

</mosaic_0001>

<llo_original>
// kernel: tpu_custom_call.1
$region0: #{tpu_custom_call.1}
  #allocation0 [shape = 'u32[]', space=smem, size = 0x4, offset = 0x4, fixed_abs, tag = 'smem constant byte address 0x4 - core index']
  #allocation1 [shape = 'u32[144,128]{1,0:T(1,128)}', space=vmem, size = 0x12000, scoped, tag = 'internal scratch']
  %s0 = inlined_call_operand.hbm [shape: bf16[16,128], index: 0, kind: input, shape index: {}]
  %s1 = inlined_call_operand.hbm [shape: bf16[128,512], index: 1, kind: input, shape index: {}]
  %s2 = inlined_call_operand.vmem [shape: f32[1,512], index: 2, kind: input, shape index: {}]
  %s3 = inlined_call_operand.hbm [shape: bf16[512,128], index: 3, kind: input, shape index: {}]
  %s4 = inlined_call_operand.vmem [shape: f32[1,128], index: 4, kind: input, shape index: {}]
  %s5 = inlined_call_operand.hbm [shape: f32[16,128], index: 5, kind: output, shape index: {}]
  %s6 = sld [smem:[#allocation0]]
  $region42: #{tpu_custom_call.1} parent=0
    _
  %s8 = ssub.s32 1, %s6
  %s9 = scalar_select 0, %s8, %s6
  $region1: #{tpu_custom_call.1} parent=0
    #allocation2 [shape = 'u8[4096]{0}', space=vmem, size = 0x1000, scoped, tag = 'input window, operand 0, single buffered']
    #allocation3 [shape = 's32[1]{0}', space=sflag, size = 0x4, scoped, tag = 'scoped memory for tpu_custom_call.1']
    #allocation4 [shape = 's32[1]{0}', space=sflag, size = 0x4, scoped, tag = 'scoped memory for tpu_custom_call.1']
    #allocation5 [shape = 'u8[131072]{0}', space=vmem, size = 0x20000, scoped, tag = 'input window, operand 1, single buffered']
    #allocation6 [shape = 's32[1]{0}', space=sflag, size = 0x4, scoped, tag = 'scoped memory for tpu_custom_call.1']
    #allocation7 [shape = 'u8[131072]{0}', space=vmem, size = 0x20000, scoped, tag = 'input window, operand 3, single buffered']
    #allocation8 [shape = 'u8[8192]{0}', space=vmem, size = 0x2000, scoped, tag = 'output window, operand 0, single buffered']
    %10 = vsyncpa [#allocation3], 0
    %11 = vsyncpa [#allocation6], 0
    %12 = vsyncpa [#allocation4], 0
    // Predicated region
    $region2: #{tpu_custom_call.1} parent=1 // pred_check
      _
    $region3: #{tpu_custom_call.1} parent=1 // pred_check_branch
      %14 = sbr.rel (0) target = $region5
    $region4: #{tpu_custom_call.1} parent=1 // pred_region
      %s16 = ssub.s32 128, 128
      %17 = vsyncadd [#allocation3], %s16
      %s18 = sshll.u32 [#allocation2], 4
      %s19 = int_to_ptr.vmem [resolvable:$true] %s18
      %24 = dma.hbm_to_vmem [thread:$0]  %s0, 128, %s19, [#allocation3], 64, 64, 4
    $region5: #{tpu_custom_call.1} parent=1 // pred_fallthru
      _
    // Predicated region
    $region6: #{tpu_custom_call.1} parent=1 // pred_check
      _
    $region7: #{tpu_custom_call.1} parent=1 // pred_check_branch
      %26 = sbr.rel (0) target = $region9
    $region8: #{tpu_custom_call.1} parent=1 // pred_region
      %s28 = ssub.s32 4096, 4096
      %29 = vsyncadd [#allocation6], %s28
      %s30 = sshll.u32 [#allocation5], 4
      %s31 = int_to_ptr.vmem [resolvable:$true] %s30
      %36 = dma.hbm_to_vmem [thread:$0]  %s1, 4096, %s31, [#allocation6], 256, 256, 16
    $region9: #{tpu_custom_call.1} parent=1 // pred_fallthru
      _
    // Predicated region
    $region10: #{tpu_custom_call.1} parent=1 // pred_check
      _
    $region11: #{tpu_custom_call.1} parent=1 // pred_check_branch
      %38 = sbr.rel (0) target = $region13
    $region12: #{tpu_custom_call.1} parent=1 // pred_region
      _
    $region13: #{tpu_custom_call.1} parent=1 // pred_fallthru
      _
    // Predicated region
    $region14: #{tpu_custom_call.1} parent=1 // pred_check
      _
    $region15: #{tpu_custom_call.1} parent=1 // pred_check_branch
      %40 = sbr.rel (0) target = $region17
    $region16: #{tpu_custom_call.1} parent=1 // pred_region
      %s42 = ssub.s32 4096, 4096
      %43 = vsyncadd [#allocation6], %s42
      %s44 = sshll.u32 [#allocation7], 4
      %s45 = int_to_ptr.vmem [resolvable:$true] %s44
      %50 = dma.hbm_to_vmem [thread:$0]  %s3, 4096, %s45, [#allocation6], 64, 64, 4
    $region17: #{tpu_custom_call.1} parent=1 // pred_fallthru
      _
    // Predicated region
    $region18: #{tpu_custom_call.1} parent=1 // pred_check
      _
    $region19: #{tpu_custom_call.1} parent=1 // pred_check_branch
      %52 = sbr.rel (0) target = $region21
    $region20: #{tpu_custom_call.1} parent=1 // pred_region
      _
    $region21: #{tpu_custom_call.1} parent=1 // pred_fallthru
      _
    // Predicated region
    $region22: #{tpu_custom_call.1} parent=1 // pred_check
      _
    $region23: #{tpu_custom_call.1} parent=1 // pred_check_branch
      %54 = sbr.rel (0) target = $region25
    $region24: #{tpu_custom_call.1} parent=1 // pred_region
      %55 = dma.done [#allocation3], 128
    $region25: #{tpu_custom_call.1} parent=1 // pred_fallthru
      _
    // Predicated region
    $region26: #{tpu_custom_call.1} parent=1 // pred_check
      _
    $region27: #{tpu_custom_call.1} parent=1 // pred_check_branch
      %57 = sbr.rel (0) target = $region29
    $region28: #{tpu_custom_call.1} parent=1 // pred_region
      %58 = dma.done [#allocation6], 4096
    $region29: #{tpu_custom_call.1} parent=1 // pred_fallthru
      _
    // Predicated region
    $region30: #{tpu_custom_call.1} parent=1 // pred_check
      _
    $region31: #{tpu_custom_call.1} parent=1 // pred_check_branch
      %60 = sbr.rel (0) target = $region33
    $region32: #{tpu_custom_call.1} parent=1 // pred_region
      %61 = dma.done [#allocation6], 4096
    $region33: #{tpu_custom_call.1} parent=1 // pred_fallthru
      _
    %v63 = vld [vmem:[#allocation2] sm:$0xf]
    %v64 = vld [vmem:[#allocation2 + $0x4] sm:$0xf]
    %v65 = vld [vmem:[#allocation5] sm:$0xff]
    %v66 = vld [vmem:[#allocation5 + $0x8] sm:$0xff]
    %v67 = vld [vmem:[#allocation5 + $0x10] sm:$0xff]
    %v68 = vld [vmem:[#allocation5 + $0x18] sm:$0xff]
    %v69 = vld [vmem:[#allocation5 + $0x20] sm:$0xff]
    %v70 = vld [vmem:[#allocation5 + $0x28] sm:$0xff]
    %v71 = vld [vmem:[#allocation5 + $0x30] sm:$0xff]
    %v72 = vld [vmem:[#allocation5 + $0x38] sm:$0xff]
    %v73 = vld [vmem:[#allocation5 + $0x40] sm:$0xff]
    %v74 = vld [vmem:[#allocation5 + $0x48] sm:$0xff]
    %v75 = vld [vmem:[#allocation5 + $0x50] sm:$0xff]
    %v76 = vld [vmem:[#allocation5 + $0x58] sm:$0xff]
    %v77 = vld [vmem:[#allocation5 + $0x60] sm:$0xff]
    %v78 = vld [vmem:[#allocation5 + $0x68] sm:$0xff]
    %v79 = vld [vmem:[#allocation5 + $0x70] sm:$0xff]
    %v80 = vld [vmem:[#allocation5 + $0x78] sm:$0xff]
    %v81 = vld [vmem:[#allocation5 + $0x80] sm:$0xff]
    %v82 = vld [vmem:[#allocation5 + $0x88] sm:$0xff]
    %v83 = vld [vmem:[#allocation5 + $0x90] sm:$0xff]
    %v84 = vld [vmem:[#allocation5 + $0x98] sm:$0xff]
    %v85 = vld [vmem:[#allocation5 + $0xa0] sm:$0xff]
    %v86 = vld [vmem:[#allocation5 + $0xa8] sm:$0xff]
    %v87 = vld [vmem:[#allocation5 + $0xb0] sm:$0xff]
    %v88 = vld [vmem:[#allocation5 + $0xb8] sm:$0xff]
    %v89 = vld [vmem:[#allocation5 + $0xc0] sm:$0xff]
    %v90 = vld [vmem:[#allocation5 + $0xc8] sm:$0xff]
    %v91 = vld [vmem:[#allocation5 + $0xd0] sm:$0xff]
    %v92 = vld [vmem:[#allocation5 + $0xd8] sm:$0xff]
    %v93 = vld [vmem:[#allocation5 + $0xe0] sm:$0xff]
    %v94 = vld [vmem:[#allocation5 + $0xe8] sm:$0xff]
    %v95 = vld [vmem:[#allocation5 + $0xf0] sm:$0xff]
    %v96 = vld [vmem:[#allocation5 + $0xf8] sm:$0xff]
    %v97 = vld [vmem:[%s2] sm:$0xf]
    %v99 = vlaneseq
    %v100 = vshrl.u32 %v99, 7
    %v101 = vsub.s32 0, %v100
    %v102 = vrot.slane %v97, %v101
    %v103 = vlaneseq
    %v104 = vshrl.u32 %v103, 7
    %v105 = vsub.s32 1, %v104
    %v106 = vrot.slane %v97, %v105
    %v107 = vlaneseq
    %v108 = vshrl.u32 %v107, 7
    %v109 = vsub.s32 2, %v108
    %v110 = vrot.slane %v97, %v109
    %v111 = vlaneseq
    %v112 = vshrl.u32 %v111, 7
    %v113 = vsub.s32 3, %v112
    %v114 = vrot.slane %v97, %v113
    %v121 = vunpack.c.l.b16 %v63
    %v122 = vunpack.c.l.b16 %v64
    %v123 = vpack.c.b16 %v122, %v121
    %v157 = vunpack.c.l.b16 %v65
    %v158 = vunpack.c.h.b16 %v65
    %v159 = vunpack.c.l.b16 %v66
    %v160 = vunpack.c.h.b16 %v66
    %v161 = vunpack.c.l.b16 %v67
    %v162 = vunpack.c.h.b16 %v67
    %v163 = vunpack.c.l.b16 %v68
    %v164 = vunpack.c.h.b16 %v68
    %v165 = vunpack.c.l.b16 %v69
    %v166 = vunpack.c.h.b16 %v69
    %v167 = vunpack.c.l.b16 %v70
    %v168 = vunpack.c.h.b16 %v70
    %v169 = vunpack.c.l.b16 %v71
    %v170 = vunpack.c.h.b16 %v71
    %v171 = vunpack.c.l.b16 %v72
    %v172 = vunpack.c.h.b16 %v72
    %v173 = vunpack.c.l.b16 %v73
    %v174 = vunpack.c.h.b16 %v73
    %v175 = vunpack.c.l.b16 %v74
    %v176 = vunpack.c.h.b16 %v74
    %v177 = vunpack.c.l.b16 %v75
    %v178 = vunpack.c.h.b16 %v75
    %v179 = vunpack.c.l.b16 %v76
    %v180 = vunpack.c.h.b16 %v76
    %v181 = vunpack.c.l.b16 %v77
    %v182 = vunpack.c.h.b16 %v77
    %v183 = vunpack.c.l.b16 %v78
    %v184 = vunpack.c.h.b16 %v78
    %v185 = vunpack.c.l.b16 %v79
    %v186 = vunpack.c.h.b16 %v79
    %v187 = vunpack.c.l.b16 %v80
    %v188 = vunpack.c.h.b16 %v80
    %v189 = vunpack.c.l.b16 %v81
    %v190 = vunpack.c.h.b16 %v81
    %v191 = vunpack.c.l.b16 %v82
    %v192 = vunpack.c.h.b16 %v82
    %v193 = vunpack.c.l.b16 %v83
    %v194 = vunpack.c.h.b16 %v83
    %v195 = vunpack.c.l.b16 %v84
    %v196 = vunpack.c.h.b16 %v84
    %v197 = vunpack.c.l.b16 %v85
    %v198 = vunpack.c.h.b16 %v85
    %v199 = vunpack.c.l.b16 %v86
    %v200 = vunpack.c.h.b16 %v86
    %v201 = vunpack.c.l.b16 %v87
    %v202 = vunpack.c.h.b16 %v87
    %v203 = vunpack.c.l.b16 %v88
    %v204 = vunpack.c.h.b16 %v88
    %v205 = vunpack.c.l.b16 %v89
    %v206 = vunpack.c.h.b16 %v89
    %v207 = vunpack.c.l.b16 %v90
    %v208 = vunpack.c.h.b16 %v90
    %v209 = vunpack.c.l.b16 %v91
    %v210 = vunpack.c.h.b16 %v91
    %v211 = vunpack.c.l.b16 %v92
    %v212 = vunpack.c.h.b16 %v92
    %v213 = vunpack.c.l.b16 %v93
    %v214 = vunpack.c.h.b16 %v93
    %v215 = vunpack.c.l.b16 %v94
    %v216 = vunpack.c.h.b16 %v94
    %v217 = vunpack.c.l.b16 %v95
    %v218 = vunpack.c.h.b16 %v95
    %v219 = vunpack.c.l.b16 %v96
    %v220 = vunpack.c.h.b16 %v96
    %v221 = vpack.c.b16 %v161, %v157
    %v222 = vpack.c.b16 %v162, %v158
    %v223 = vpack.c.b16 %v163, %v159
    %v224 = vpack.c.b16 %v164, %v160
    %v225 = vpack.c.b16 %v169, %v165
    %v226 = vpack.c.b16 %v170, %v166
    %v227 = vpack.c.b16 %v171, %v167
    %v228 = vpack.c.b16 %v172, %v168
    %v229 = vpack.c.b16 %v177, %v173
    %v230 = vpack.c.b16 %v178, %v174
    %v231 = vpack.c.b16 %v179, %v175
    %v232 = vpack.c.b16 %v180, %v176
    %v233 = vpack.c.b16 %v185, %v181
    %v234 = vpack.c.b16 %v186, %v182
    %v235 = vpack.c.b16 %v187, %v183
    %v236 = vpack.c.b16 %v188, %v184
    %v237 = vpack.c.b16 %v193, %v189
    %v238 = vpack.c.b16 %v194, %v190
    %v239 = vpack.c.b16 %v195, %v191
    %v240 = vpack.c.b16 %v196, %v192
    %v241 = vpack.c.b16 %v201, %v197
    %v242 = vpack.c.b16 %v202, %v198
    %v243 = vpack.c.b16 %v203, %v199
    %v244 = vpack.c.b16 %v204, %v200
    %v245 = vpack.c.b16 %v209, %v205
    %v246 = vpack.c.b16 %v210, %v206
    %v247 = vpack.c.b16 %v211, %v207
    %v248 = vpack.c.b16 %v212, %v208
    %v249 = vpack.c.b16 %v217, %v213
    %v250 = vpack.c.b16 %v218, %v214
    %v251 = vpack.c.b16 %v219, %v215
    %v252 = vpack.c.b16 %v220, %v216
    %285 = vmatprep.subr.bf16.mxu0 %v222
    %286 = vmatpush1.bf16.msra.mxu0 %v221
    %287 = vmatprep.subr.bf16.mxu0 %v226
    %288 = vmatpush1.bf16.msra.mxu0 %v225
    %289 = vmatprep.subr.bf16.mxu0 %v230
    %290 = vmatpush1.bf16.msra.mxu0 %v229
    %291 = vmatprep.subr.bf16.mxu0 %v234
    %292 = vmatpush1.bf16.msra.mxu0 %v233
    %293 = vmatprep.subr.bf16.mxu0 %v238
    %294 = vmatpush1.bf16.msra.mxu0 %v237
    %295 = vmatprep.subr.bf16.mxu0 %v242
    %296 = vmatpush1.bf16.msra.mxu0 %v241
    %297 = vmatprep.subr.bf16.mxu0 %v246
    %298 = vmatpush1.bf16.msra.mxu0 %v245
    %299 = vmatprep.subr.bf16.mxu0 %v250
    %300 = vmatpush1.bf16.msra.mxu0 %v249
    %301 = vmatprep.subr.bf16.mxu0 0
    %302 = vmatpush1.bf16.msra.mxu0 0
    %303 = vmatprep.subr.bf16.mxu0 0
    %304 = vmatpush1.bf16.msra.mxu0 0
    %305 = vmatprep.subr.bf16.mxu0 0
    %306 = vmatpush1.bf16.msra.mxu0 0
    %307 = vmatprep.subr.bf16.mxu0 0
    %308 = vmatpush1.bf16.msra.mxu0 0
    %309 = vmatprep.subr.bf16.mxu0 0
    %310 = vmatpush1.bf16.msra.mxu0 0
    %311 = vmatprep.subr.bf16.mxu0 0
    %312 = vmatpush1.bf16.msra.mxu0 0
    %313 = vmatprep.subr.bf16.mxu0 0
    %314 = vmatpush1.bf16.msra.mxu0 0
    %315 = vmatprep.subr.bf16.mxu0 0
    %316 = vmatpush1.bf16.msra.mxu0 0
    %317 = vmatprep.mubr.bf16.mxu0 0
    %318 = vmatmul.mubr.bf16.gmra.mrb[0].mxu0 %v123
    %v319 = vpop.f32.mrb[0].mxu0
    %v320 = vadd.f32 %v102, %v319
    %v321 = vpop.f32.mrb[0].mxu0
    %v322 = vadd.f32 %v106, %v321
    %v323 = vpop.f32.mrb[0].mxu0
    %v324 = vadd.f32 %v102, %v323
    %v325 = vpop.f32.mrb[0].mxu0
    %v326 = vadd.f32 %v106, %v325
    %327 = vdwg.mxu0
    %328 = vmatprep.subr.bf16.mxu0 %v224
    %329 = vmatpush1.bf16.msra.mxu0 %v223
    %330 = vmatprep.subr.bf16.mxu0 %v228
    %331 = vmatpush1.bf16.msra.mxu0 %v227
    %332 = vmatprep.subr.bf16.mxu0 %v232
    %333 = vmatpush1.bf16.msra.mxu0 %v231
    %334 = vmatprep.subr.bf16.mxu0 %v236
    %335 = vmatpush1.bf16.msra.mxu0 %v235
    %336 = vmatprep.subr.bf16.mxu0 %v240
    %337 = vmatpush1.bf16.msra.mxu0 %v239
    %338 = vmatprep.subr.bf16.mxu0 %v244
    %339 = vmatpush1.bf16.msra.mxu0 %v243
    %340 = vmatprep.subr.bf16.mxu0 %v248
    %341 = vmatpush1.bf16.msra.mxu0 %v247
    %342 = vmatprep.subr.bf16.mxu0 %v252
    %343 = vmatpush1.bf16.msra.mxu0 %v251
    %344 = vmatprep.subr.bf16.mxu0 0
    %345 = vmatpush1.bf16.msra.mxu0 0
    %346 = vmatprep.subr.bf16.mxu0 0
    %347 = vmatpush1.bf16.msra.mxu0 0
    %348 = vmatprep.subr.bf16.mxu0 0
    %349 = vmatpush1.bf16.msra.mxu0 0
    %350 = vmatprep.subr.bf16.mxu0 0
    %351 = vmatpush1.bf16.msra.mxu0 0
    %352 = vmatprep.subr.bf16.mxu0 0
    %353 = vmatpush1.bf16.msra.mxu0 0
    %354 = vmatprep.subr.bf16.mxu0 0
    %355 = vmatpush1.bf16.msra.mxu0 0
    %356 = vmatprep.subr.bf16.mxu0 0
    %357 = vmatpush1.bf16.msra.mxu0 0
    %358 = vmatprep.subr.bf16.mxu0 0
    %359 = vmatpush1.bf16.msra.mxu0 0
    %360 = vmatprep.mubr.bf16.mxu0 0
    %361 = vmatmul.mubr.bf16.gmra.mrb[0].mxu0 %v123
    %v362 = vpop.f32.mrb[0].mxu0
    %v363 = vadd.f32 %v110, %v362
    %v364 = vpop.f32.mrb[0].mxu0
    %v365 = vadd.f32 %v114, %v364
    %v366 = vpop.f32.mrb[0].mxu0
    %v367 = vadd.f32 %v110, %v366
    %v368 = vpop.f32.mrb[0].mxu0
    %v369 = vadd.f32 %v114, %v368
    %370 = vdwg.mxu0
    %v371 = vmul.f32 %v320, 0.5
    %v372 = vmul.f32 %v322, 0.5
    %v373 = vmul.f32 %v363, 0.5
    %v374 = vmul.f32 %v365, 0.5
    %v375 = vmul.f32 %v324, 0.5
    %v376 = vmul.f32 %v326, 0.5
    %v377 = vmul.f32 %v367, 0.5
    %v378 = vmul.f32 %v369, 0.5
    %v379 = vmul.f32 %v320, 0.70710677
    %v380 = vmul.f32 %v322, 0.70710677
    %v381 = vmul.f32 %v363, 0.70710677
    %v382 = vmul.f32 %v365, 0.70710677
    %v383 = vmul.f32 %v324, 0.70710677
    %v384 = vmul.f32 %v326, 0.70710677
    %v385 = vmul.f32 %v367, 0.70710677
    %v386 = vmul.f32 %v369, 0.70710677
    %v387 = verf.f32.pop %v379
    %v388 = verf.f32.pop %v380
    %v389 = verf.f32.pop %v381
    %v390 = verf.f32.pop %v382
    %v391 = verf.f32.pop %v383
    %v392 = verf.f32.pop %v384
    %v393 = verf.f32.pop %v385
    %v394 = verf.f32.pop %v386
    %v395 = vadd.f32 %v387, 1.0
    %v396 = vadd.f32 %v388, 1.0
    %v397 = vadd.f32 %v389, 1.0
    %v398 = vadd.f32 %v390, 1.0
    %v399 = vadd.f32 %v391, 1.0
    %v400 = vadd.f32 %v392, 1.0
    %v401 = vadd.f32 %v393, 1.0
    %v402 = vadd.f32 %v394, 1.0
    %v403 = vmul.f32 %v371, %v395
    %v404 = vmul.f32 %v372, %v396
    %v405 = vmul.f32 %v373, %v397
    %v406 = vmul.f32 %v374, %v398
    %v407 = vmul.f32 %v375, %v399
    %v408 = vmul.f32 %v376, %v400
    %v409 = vmul.f32 %v377, %v401
    %v410 = vmul.f32 %v378, %v402
    %v411 = vpack.c.bf16 %v407, %v403
    %v412 = vpack.c.bf16 %v408, %v404
    %v413 = vpack.c.bf16 %v409, %v405
    %v414 = vpack.c.bf16 %v410, %v406
    %v415 = vld [vmem:[#allocation7] sm:$0xf]
    %v416 = vld [vmem:[#allocation7 + $0x4] sm:$0xf]
    %v417 = vld [vmem:[#allocation7 + $0x8] sm:$0xf]
    %v418 = vld [vmem:[#allocation7 + $0xc] sm:$0xf]
    %v419 = vld [vmem:[#allocation7 + $0x10] sm:$0xf]
    %v420 = vld [vmem:[#allocation7 + $0x14] sm:$0xf]
    %v421 = vld [vmem:[#allocation7 + $0x18] sm:$0xf]
    %v422 = vld [vmem:[#allocation7 + $0x1c] sm:$0xf]
    %v423 = vld [vmem:[#allocation7 + $0x20] sm:$0xf]
    %v424 = vld [vmem:[#allocation7 + $0x24] sm:$0xf]
    %v425 = vld [vmem:[#allocation7 + $0x28] sm:$0xf]
    %v426 = vld [vmem:[#allocation7 + $0x2c] sm:$0xf]
    %v427 = vld [vmem:[#allocation7 + $0x30] sm:$0xf]
    %v428 = vld [vmem:[#allocation7 + $0x34] sm:$0xf]
    %v429 = vld [vmem:[#allocation7 + $0x38] sm:$0xf]
    %v430 = vld [vmem:[#allocation7 + $0x3c] sm:$0xf]
    %v431 = vld [vmem:[#allocation7 + $0x40] sm:$0xf]
    %v432 = vld [vmem:[#allocation7 + $0x44] sm:$0xf]
    %v433 = vld [vmem:[#allocation7 + $0x48] sm:$0xf]
    %v434 = vld [vmem:[#allocation7 + $0x4c] sm:$0xf]
    %v435 = vld [vmem:[#allocation7 + $0x50] sm:$0xf]
    %v436 = vld [vmem:[#allocation7 + $0x54] sm:$0xf]
    %v437 = vld [vmem:[#allocation7 + $0x58] sm:$0xf]
    %v438 = vld [vmem:[#allocation7 + $0x5c] sm:$0xf]
    %v439 = vld [vmem:[#allocation7 + $0x60] sm:$0xf]
    %v440 = vld [vmem:[#allocation7 + $0x64] sm:$0xf]
    %v441 = vld [vmem:[#allocation7 + $0x68] sm:$0xf]
    %v442 = vld [vmem:[#allocation7 + $0x6c] sm:$0xf]
    %v443 = vld [vmem:[#allocation7 + $0x70] sm:$0xf]
    %v444 = vld [vmem:[#allocation7 + $0x74] sm:$0xf]
    %v445 = vld [vmem:[#allocation7 + $0x78] sm:$0xf]
    %v446 = vld [vmem:[#allocation7 + $0x7c] sm:$0xf]
    %v447 = vld [vmem:[#allocation7 + $0x80] sm:$0xf]
    %v448 = vld [vmem:[#allocation7 + $0x84] sm:$0xf]
    %v449 = vld [vmem:[#allocation7 + $0x88] sm:$0xf]
    %v450 = vld [vmem:[#allocation7 + $0x8c] sm:$0xf]
    %v451 = vld [vmem:[#allocation7 + $0x90] sm:$0xf]
    %v452 = vld [vmem:[#allocation7 + $0x94] sm:$0xf]
    %v453 = vld [vmem:[#allocation7 + $0x98] sm:$0xf]
    %v454 = vld [vmem:[#allocation7 + $0x9c] sm:$0xf]
    %v455 = vld [vmem:[#allocation7 + $0xa0] sm:$0xf]
    %v456 = vld [vmem:[#allocation7 + $0xa4] sm:$0xf]
    %v457 = vld [vmem:[#allocation7 + $0xa8] sm:$0xf]
    %v458 = vld [vmem:[#allocation7 + $0xac] sm:$0xf]
    %v459 = vld [vmem:[#allocation7 + $0xb0] sm:$0xf]
    %v460 = vld [vmem:[#allocation7 + $0xb4] sm:$0xf]
    %v461 = vld [vmem:[#allocation7 + $0xb8] sm:$0xf]
    %v462 = vld [vmem:[#allocation7 + $0xbc] sm:$0xf]
    %v463 = vld [vmem:[#allocation7 + $0xc0] sm:$0xf]
    %v464 = vld [vmem:[#allocation7 + $0xc4] sm:$0xf]
    %v465 = vld [vmem:[#allocation7 + $0xc8] sm:$0xf]
    %v466 = vld [vmem:[#allocation7 + $0xcc] sm:$0xf]
    %v467 = vld [vmem:[#allocation7 + $0xd0] sm:$0xf]
    %v468 = vld [vmem:[#allocation7 + $0xd4] sm:$0xf]
    %v469 = vld [vmem:[#allocation7 + $0xd8] sm:$0xf]
    %v470 = vld [vmem:[#allocation7 + $0xdc] sm:$0xf]
    %v471 = vld [vmem:[#allocation7 + $0xe0] sm:$0xf]
    %v472 = vld [vmem:[#allocation7 + $0xe4] sm:$0xf]
    %v473 = vld [vmem:[#allocation7 + $0xe8] sm:$0xf]
    %v474 = vld [vmem:[#allocation7 + $0xec] sm:$0xf]
    %v475 = vld [vmem:[#allocation7 + $0xf0] sm:$0xf]
    %v476 = vld [vmem:[#allocation7 + $0xf4] sm:$0xf]
    %v477 = vld [vmem:[#allocation7 + $0xf8] sm:$0xf]
    %v478 = vld [vmem:[#allocation7 + $0xfc] sm:$0xf]
    %v479 = vld [vmem:[%s4] sm:$0x1]
    %v481 = vlaneseq
    %v482 = vshrl.u32 %v481, 7
    %v483 = vsub.s32 0, %v482
    %v484 = vrot.slane %v479, %v483
    %v550 = vunpack.c.l.b16 %v415
    %v551 = vunpack.c.l.b16 %v416
    %v552 = vunpack.c.l.b16 %v417
    %v553 = vunpack.c.l.b16 %v418
    %v554 = vunpack.c.l.b16 %v419
    %v555 = vunpack.c.l.b16 %v420
    %v556 = vunpack.c.l.b16 %v421
    %v557 = vunpack.c.l.b16 %v422
    %v558 = vunpack.c.l.b16 %v423
    %v559 = vunpack.c.l.b16 %v424
    %v560 = vunpack.c.l.b16 %v425
    %v561 = vunpack.c.l.b16 %v426
    %v562 = vunpack.c.l.b16 %v427
    %v563 = vunpack.c.l.b16 %v428
    %v564 = vunpack.c.l.b16 %v429
    %v565 = vunpack.c.l.b16 %v430
    %v566 = vunpack.c.l.b16 %v431
    %v567 = vunpack.c.l.b16 %v432
    %v568 = vunpack.c.l.b16 %v433
    %v569 = vunpack.c.l.b16 %v434
    %v570 = vunpack.c.l.b16 %v435
    %v571 = vunpack.c.l.b16 %v436
    %v572 = vunpack.c.l.b16 %v437
    %v573 = vunpack.c.l.b16 %v438
    %v574 = vunpack.c.l.b16 %v439
    %v575 = vunpack.c.l.b16 %v440
    %v576 = vunpack.c.l.b16 %v441
    %v577 = vunpack.c.l.b16 %v442
    %v578 = vunpack.c.l.b16 %v443
    %v579 = vunpack.c.l.b16 %v444
    %v580 = vunpack.c.l.b16 %v445
    %v581 = vunpack.c.l.b16 %v446
    %v582 = vunpack.c.l.b16 %v447
    %v583 = vunpack.c.l.b16 %v448
    %v584 = vunpack.c.l.b16 %v449
    %v585 = vunpack.c.l.b16 %v450
    %v586 = vunpack.c.l.b16 %v451
    %v587 = vunpack.c.l.b16 %v452
    %v588 = vunpack.c.l.b16 %v453
    %v589 = vunpack.c.l.b16 %v454
    %v590 = vunpack.c.l.b16 %v455
    %v591 = vunpack.c.l.b16 %v456
    %v592 = vunpack.c.l.b16 %v457
    %v593 = vunpack.c.l.b16 %v458
    %v594 = vunpack.c.l.b16 %v459
    %v595 = vunpack.c.l.b16 %v460
    %v596 = vunpack.c.l.b16 %v461
    %v597 = vunpack.c.l.b16 %v462
    %v598 = vunpack.c.l.b16 %v463
    %v599 = vunpack.c.l.b16 %v464
    %v600 = vunpack.c.l.b16 %v465
    %v601 = vunpack.c.l.b16 %v466
    %v602 = vunpack.c.l.b16 %v467
    %v603 = vunpack.c.l.b16 %v468
    %v604 = vunpack.c.l.b16 %v469
    %v605 = vunpack.c.l.b16 %v470
    %v606 = vunpack.c.l.b16 %v471
    %v607 = vunpack.c.l.b16 %v472
    %v608 = vunpack.c.l.b16 %v473
    %v609 = vunpack.c.l.b16 %v474
    %v610 = vunpack.c.l.b16 %v475
    %v611 = vunpack.c.l.b16 %v476
    %v612 = vunpack.c.l.b16 %v477
    %v613 = vunpack.c.l.b16 %v478
    %v614 = vpack.c.b16 %v551, %v550
    %v615 = vpack.c.b16 %v553, %v552
    %v616 = vpack.c.b16 %v555, %v554
    %v617 = vpack.c.b16 %v557, %v556
    %v618 = vpack.c.b16 %v559, %v558
    %v619 = vpack.c.b16 %v561, %v560
    %v620 = vpack.c.b16 %v563, %v562
    %v621 = vpack.c.b16 %v565, %v564
    %v622 = vpack.c.b16 %v567, %v566
    %v623 = vpack.c.b16 %v569, %v568
    %v624 = vpack.c.b16 %v571, %v570
    %v625 = vpack.c.b16 %v573, %v572
    %v626 = vpack.c.b16 %v575, %v574
    %v627 = vpack.c.b16 %v577, %v576
    %v628 = vpack.c.b16 %v579, %v578
    %v629 = vpack.c.b16 %v581, %v580
    %v630 = vpack.c.b16 %v583, %v582
    %v631 = vpack.c.b16 %v585, %v584
    %v632 = vpack.c.b16 %v587, %v586
    %v633 = vpack.c.b16 %v589, %v588
    %v634 = vpack.c.b16 %v591, %v590
    %v635 = vpack.c.b16 %v593, %v592
    %v636 = vpack.c.b16 %v595, %v594
    %v637 = vpack.c.b16 %v597, %v596
    %v638 = vpack.c.b16 %v599, %v598
    %v639 = vpack.c.b16 %v601, %v600
    %v640 = vpack.c.b16 %v603, %v602
    %v641 = vpack.c.b16 %v605, %v604
    %v642 = vpack.c.b16 %v607, %v606
    %v643 = vpack.c.b16 %v609, %v608
    %v644 = vpack.c.b16 %v611, %v610
    %v645 = vpack.c.b16 %v613, %v612
    %678 = vmatprep.subr.bf16.mxu0 0
    %679 = vmatpush1.bf16.msra.mxu0 %v614
    %680 = vmatprep.subr.bf16.mxu0 0
    %681 = vmatpush1.bf16.msra.mxu0 %v615
    %682 = vmatprep.subr.bf16.mxu0 0
    %683 = vmatpush1.bf16.msra.mxu0 %v616
    %684 = vmatprep.subr.bf16.mxu0 0
    %685 = vmatpush1.bf16.msra.mxu0 %v617
    %686 = vmatprep.subr.bf16.mxu0 0
    %687 = vmatpush1.bf16.msra.mxu0 %v618
    %688 = vmatprep.subr.bf16.mxu0 0
    %689 = vmatpush1.bf16.msra.mxu0 %v619
    %690 = vmatprep.subr.bf16.mxu0 0
    %691 = vmatpush1.bf16.msra.mxu0 %v620
    %692 = vmatprep.subr.bf16.mxu0 0
    %693 = vmatpush1.bf16.msra.mxu0 %v621
    %694 = vmatprep.subr.bf16.mxu0 0
    %695 = vmatpush1.bf16.msra.mxu0 %v622
    %696 = vmatprep.subr.bf16.mxu0 0
    %697 = vmatpush1.bf16.msra.mxu0 %v623
    %698 = vmatprep.subr.bf16.mxu0 0
    %699 = vmatpush1.bf16.msra.mxu0 %v624
    %700 = vmatprep.subr.bf16.mxu0 0
    %701 = vmatpush1.bf16.msra.mxu0 %v625
    %702 = vmatprep.subr.bf16.mxu0 0
    %703 = vmatpush1.bf16.msra.mxu0 %v626
    %704 = vmatprep.subr.bf16.mxu0 0
    %705 = vmatpush1.bf16.msra.mxu0 %v627
    %706 = vmatprep.subr.bf16.mxu0 0
    %707 = vmatpush1.bf16.msra.mxu0 %v628
    %708 = vmatprep.subr.bf16.mxu0 0
    %709 = vmatpush1.bf16.msra.mxu0 %v629
    %710 = vmatprep.mubr.bf16.mxu0 %v412
    %711 = vmatmul.mubr.bf16.gmra.mrb[0].mxu0 %v411
    %v712 = vpop.f32.mrb[0].mxu0
    %v713 = vadd.f32 %v484, %v712
    %v714 = vpop.f32.mrb[0].mxu0
    %v715 = vpop.f32.mrb[0].mxu0
    %v716 = vadd.f32 %v484, %v715
    %v717 = vpop.f32.mrb[0].mxu0
    %718 = vdwg.mxu0
    %719 = vmatprep.subr.bf16.mxu0 0
    %720 = vmatpush1.bf16.msra.mxu0 %v630
    %721 = vmatprep.subr.bf16.mxu0 0
    %722 = vmatpush1.bf16.msra.mxu0 %v631
    %723 = vmatprep.subr.bf16.mxu0 0
    %724 = vmatpush1.bf16.msra.mxu0 %v632
    %725 = vmatprep.subr.bf16.mxu0 0
    %726 = vmatpush1.bf16.msra.mxu0 %v633
    %727 = vmatprep.subr.bf16.mxu0 0
    %728 = vmatpush1.bf16.msra.mxu0 %v634
    %729 = vmatprep.subr.bf16.mxu0 0
    %730 = vmatpush1.bf16.msra.mxu0 %v635
    %731 = vmatprep.subr.bf16.mxu0 0
    %732 = vmatpush1.bf16.msra.mxu0 %v636
    %733 = vmatprep.subr.bf16.mxu0 0
    %734 = vmatpush1.bf16.msra.mxu0 %v637
    %735 = vmatprep.subr.bf16.mxu0 0
    %736 = vmatpush1.bf16.msra.mxu0 %v638
    %737 = vmatprep.subr.bf16.mxu0 0
    %738 = vmatpush1.bf16.msra.mxu0 %v639
    %739 = vmatprep.subr.bf16.mxu0 0
    %740 = vmatpush1.bf16.msra.mxu0 %v640
    %741 = vmatprep.subr.bf16.mxu0 0
    %742 = vmatpush1.bf16.msra.mxu0 %v641
    %743 = vmatprep.subr.bf16.mxu0 0
    %744 = vmatpush1.bf16.msra.mxu0 %v642
    %745 = vmatprep.subr.bf16.mxu0 0
    %746 = vmatpush1.bf16.msra.mxu0 %v643
    %747 = vmatprep.subr.bf16.mxu0 0
    %748 = vmatpush1.bf16.msra.mxu0 %v644
    %749 = vmatprep.subr.bf16.mxu0 0
    %750 = vmatpush1.bf16.msra.mxu0 %v645
    %751 = vmatprep.mubr.bf16.mxu0 %v414
    %752 = vmatmul.mubr.bf16.gmra.mrb[0].mxu0 %v413
    %v753 = vpop.f32.mrb[0].mxu0
    %v754 = vadd.f32 %v713, %v753
    %v755 = vpop.f32.mrb[0].mxu0
    %v756 = vpop.f32.mrb[0].mxu0
    %v757 = vadd.f32 %v716, %v756
    %v758 = vpop.f32.mrb[0].mxu0
    %759 = vdwg.mxu0
    %760 = vst [vmem:[#allocation8] sm:$0xff] %v754
    %761 = vst [vmem:[#allocation8 + $0x8] sm:$0xff] %v757
    // Predicated region
    $region34: #{tpu_custom_call.1} parent=1 // pred_check
      _
    $region35: #{tpu_custom_call.1} parent=1 // pred_check_branch
      %763 = sbr.rel (0) target = $region37
    $region36: #{tpu_custom_call.1} parent=1 // pred_region
      %s765 = ssub.s32 256, 256
      %766 = vsyncadd [#allocation4], %s765
      %s767 = sshll.u32 [#allocation8], 4
      %s768 = int_to_ptr.vmem [resolvable:$true] %s767
      %773 = dma.vmem_to_hbm [thread:$0]  %s768, 256, %s5, [#allocation4], 128, 128, 8
    $region37: #{tpu_custom_call.1} parent=1 // pred_fallthru
      _
    // Predicated region
    $region38: #{tpu_custom_call.1} parent=1 // pred_check
      _
    $region39: #{tpu_custom_call.1} parent=1 // pred_check_branch
      %775 = sbr.rel (0) target = $region41
    $region40: #{tpu_custom_call.1} parent=1 // pred_region
      %776 = dma.done [#allocation4], 256
    $region41: #{tpu_custom_call.1} parent=1 // pred_fallthru
      _
    %777 = vsyncpa [#allocation3], 1
    %778 = vsyncpa [#allocation6], 1
    %779 = vsyncpa [#allocation4], 1

</llo_original>
